<compile_context>
chip_gen: v5e
topology: v5e:2x2
jax: 0.10.0
libtpu: 0.0.40
codegen_flags: <defaults>
</compile_context>

<pallas_src>
import math

import jax
import jax.numpy as jnp
from jax.experimental import pallas as pl
from jax.experimental.pallas import tpu as pltpu


# ---------------------------------------------------------------------------
# Kernel: one row-tile step = two matmuls against the resident fused weight.
# ---------------------------------------------------------------------------
def _io_fe_kernel(inp_ref, out_ref, w_ref, b_ref, o_ref):
    w = w_ref[...]
    b = b_ref[...]                                   # f32 bias, broadcast add
    yi = jnp.dot(inp_ref[...], w, preferred_element_type=jnp.float32) + b
    yo = jnp.dot(out_ref[...], w, preferred_element_type=jnp.float32) + b
    o_ref[0] = yi.astype(o_ref.dtype)                # rows from `input`
    o_ref[1] = yo.astype(o_ref.dtype)                # rows from `output`


# ---------------------------------------------------------------------------
# One-time glue: fuse the three bias-ful Linear layers into a single affine map.
# Call once (e.g. at model init) and reuse the result on every forward.
# ---------------------------------------------------------------------------
def prepare_io_fe(params, *, x_dtype=None, pad_lanes=False):
    f32 = jnp.float32
    if x_dtype is None:
        x_dtype = params["w1"].dtype
    w1t = params["w1"].astype(f32).T                 # [d_in, d_in]
    w2t = params["w2"].astype(f32).T                 # [d_in, d_fe]
    w3t = params["w3"].astype(f32).T                 # [d_fe, d_fe]
    b1 = params["b1"].astype(f32).reshape(1, -1)
    b2 = params["b2"].astype(f32).reshape(1, -1)
    b3 = params["b3"].astype(f32).reshape(1, -1)
    w_total = (w1t @ w2t) @ w3t                      # [d_in, d_fe]
    b_total = (b1 @ w2t + b2) @ w3t + b3             # [1, d_fe], kept f32
    d_in, d_fe = w_total.shape

    d_fe_pad = d_fe
    if pad_lanes and d_fe % 128 != 0:
        # Lane-dense output (unmasked vst) — v5e's biggest lever.  Trade-off:
        # one output column-slice after the kernel.
        d_fe_pad = ((d_fe + 127) // 128) * 128
        w_total = jnp.pad(w_total, ((0, 0), (0, d_fe_pad - d_fe)))
        b_total = jnp.pad(b_total, ((0, 0), (0, d_fe_pad - d_fe)))

    return dict(w=w_total.astype(x_dtype), b=b_total,
                d_in=d_in, d_fe=d_fe, d_fe_pad=d_fe_pad)


# ---------------------------------------------------------------------------
# Forward pass.
# ---------------------------------------------------------------------------
def io_fe_forward(inp, out, fused, *, tm=None, force_pallas=False):
    """Pallas implementation of IO_fe.forward.

    inp, out : [B, D_in] each (logically concatenated along rows, torch.cat dim=0)
    fused    : result of prepare_io_fe(params) — cached fused affine map.
    """
    B, d_in = inp.shape
    assert out.shape == (B, d_in), "input and output must have the same shape"
    assert d_in == fused["d_in"]
    w, b = fused["w"], fused["b"]
    d_fe, d_fe_pad = fused["d_fe"], fused["d_fe_pad"]
    itemsize_x = jnp.dtype(inp.dtype).itemsize

    # --- tiny-problem dispatch: a bare affine map fuses better in plain XLA ---
    tiny = 2 * B * (d_in + d_fe_pad) * itemsize_x < (256 << 10)
    if tiny and not force_pallas:
        x = jnp.concatenate([inp, out], axis=0)
        y = (jnp.dot(x, w, preferred_element_type=jnp.float32) + b).astype(inp.dtype)
        return y[:, :d_fe]

    # --- row tiling: size the tile from a VMEM budget --------------------------
    # Sublane packing alignment: 8 for 4-byte, 16 for 2-byte, 32 for 1-byte dtypes.
    row_align = 8 * max(1, 4 // itemsize_x)

    vmem_budget = 20 * 1024 * 1024                   # headroom under 32 MiB scoped
    w_bytes = 2 * (w.size * w.dtype.itemsize + b.size * b.dtype.itemsize)
    # 2 input arrays x 2 buffers + 1 output array (2 sources wide) x 2 buffers.
    per_row = 2 * 2 * d_in * itemsize_x + 2 * 2 * d_fe_pad * itemsize_x
    tm_budget = max(row_align, (vmem_budget - w_bytes) // per_row)

    tm_eff = tm_budget if tm is None else min(tm, tm_budget)
    tm_eff = max(row_align, (tm_eff // row_align) * row_align)
    if B < 2 * row_align:
        tm_eff = B                                   # full-array block (tiny B)
    elif B <= tm_eff:
        # Split rows into >=2 tiles so the v7x megacore uses both TensorCores.
        half = -(-B // 2)
        tm_eff = ((half + row_align - 1) // row_align) * row_align
    n_tiles = pl.cdiv(B, tm_eff)                     # ragged last tile is masked

    cost = pl.CostEstimate(
        flops=2 * (2 * B) * d_in * d_fe_pad,
        transcendentals=0,
        bytes_accessed=2 * B * d_in * itemsize_x
        + 2 * B * d_fe_pad * itemsize_x
        + w.size * w.dtype.itemsize + b.size * b.dtype.itemsize,
    )

    # NOTE: at production dims, mark the resident W/b specs
    # pipeline_mode=pl.Buffered(1) (constant index_map -> double-buffering them
    # buys nothing and doubles their VMEM footprint).  Left default here.
    y = pl.pallas_call(
        _io_fe_kernel,
        out_shape=jax.ShapeDtypeStruct((2, B, d_fe_pad), inp.dtype),
        grid_spec=pltpu.PrefetchScalarGridSpec(
            num_scalar_prefetch=0,
            grid=(n_tiles,),
            in_specs=[
                pl.BlockSpec((tm_eff, d_in), lambda i: (i, 0)),   # input rows
                pl.BlockSpec((tm_eff, d_in), lambda i: (i, 0)),   # output rows
                pl.BlockSpec((d_in, d_fe_pad), lambda i: (0, 0)), # fused W (resident)
                pl.BlockSpec((1, d_fe_pad), lambda i: (0, 0)),    # fused b (f32, resident)
            ],
            out_specs=pl.BlockSpec((2, tm_eff, d_fe_pad), lambda i: (0, i, 0)),
        ),
        compiler_params=pltpu.CompilerParams(
            dimension_semantics=("parallel",),
            vmem_limit_bytes=32 * 1024 * 1024,
        ),
        cost_estimate=cost,
    )(inp, out, w, b)

    if d_fe_pad != d_fe:
        y = y[:, :, :d_fe]                           # lane-padding trade-off
    return y.reshape(2 * B, d_fe)                    # matches torch.cat row order


# ---------------------------------------------------------------------------
# Parameter init + pure-JAX reference (layer-by-layer, matches PyTorch exactly).
# ---------------------------------------------------------------------------
def init_io_fe_params(key, io_input_dim, io_feature_extractor_dim, dtype=jnp.float32):
    ks = jax.random.split(key, 6)

    def lin(kw, kb, fan_in, fan_out):
        bound = 1.0 / math.sqrt(fan_in)
        w = jax.random.uniform(kw, (fan_out, fan_in), dtype, -bound, bound)
        b = jax.random.uniform(kb, (fan_out,), dtype, -bound, bound)
        return w, b

    w1, b1 = lin(ks[0], ks[1], io_input_dim, io_input_dim)
    w2, b2 = lin(ks[2], ks[3], io_input_dim, io_feature_extractor_dim)
    w3, b3 = lin(ks[4], ks[5], io_feature_extractor_dim, io_feature_extractor_dim)
    return dict(w1=w1, b1=b1, w2=w2, b2=b2, w3=w3, b3=b3)


def io_fe_reference(inp, out, p):
    x = jnp.concatenate([inp, out], axis=0)
    h = x @ p["w1"].T + p["b1"]
    h = h @ p["w2"].T + p["b2"]
    h = h @ p["w3"].T + p["b3"]
    return h


if __name__ == "__main__":
    io_input_dim = 32
    io_feature_extractor_dim = 48

    key = jax.random.PRNGKey(0)
    k_in, k_out, k_p, k_in2, k_out2 = jax.random.split(key, 5)
    params = init_io_fe_params(k_p, io_input_dim, io_feature_extractor_dim)

    # One-time fused affine maps (cached; not recomputed per call).
    fused = prepare_io_fe(params)
    fused_lane = prepare_io_fe(params, pad_lanes=True)   # lane-dense output variant

    # Case 1: tiny batch (single full-array block).
    B1 = 4
    inp1 = jax.random.normal(k_in, (B1, io_input_dim), jnp.float32)
    out1 = jax.random.normal(k_out, (B1, io_input_dim), jnp.float32)
    ref1 = io_fe_reference(inp1, out1, params)

    y1 = jax.block_until_ready(io_fe_forward(inp1, out1, fused, force_pallas=True))
    assert y1.shape == (2 * B1, io_feature_extractor_dim)
    assert jnp.allclose(y1, ref1, atol=1e-4, rtol=1e-3), "pallas mismatch (B=4)"

    y1p = jax.block_until_ready(io_fe_forward(inp1, out1, fused_lane, force_pallas=True))
    assert jnp.allclose(y1p, ref1, atol=1e-4, rtol=1e-3), "pallas lane-padded mismatch"

    y1x = jax.block_until_ready(io_fe_forward(inp1, out1, fused))   # XLA fast path
    assert jnp.allclose(y1x, ref1, atol=1e-4, rtol=1e-3), "xla fast-path mismatch"

    # Case 2: multi-tile grid with a ragged (masked) last row tile.
    B2 = 300
    inp2 = jax.random.normal(k_in2, (B2, io_input_dim), jnp.float32)
    out2 = jax.random.normal(k_out2, (B2, io_input_dim), jnp.float32)
    ref2 = io_fe_reference(inp2, out2, params)

    y2 = jax.block_until_ready(io_fe_forward(inp2, out2, fused, force_pallas=True))
    assert y2.shape == (2 * B2, io_feature_extractor_dim)
    assert jnp.allclose(y2, ref2, atol=1e-4, rtol=1e-3), "pallas mismatch (B=300)"

    print("KERNEL_OK")
</pallas_src>

<mosaic_0001>
module attributes {stable_mosaic.version = 11 : i64} {
  func.func @_io_fe_kernel(%arg0: i32, %arg1: memref<4x32xf32, #tpu.memory_space<vmem>>, %arg2: memref<4x32xf32, #tpu.memory_space<vmem>>, %arg3: memref<32x48xf32, #tpu.memory_space<vmem>>, %arg4: memref<1x48xf32, #tpu.memory_space<vmem>>, %arg5: memref<2x4x48xf32, #tpu.memory_space<vmem>>) attributes {dimension_semantics = [#tpu.dimension_semantics<parallel>], iteration_bounds = array<i64: 1>, scalar_prefetch = 0 : i64, scratch_operands = 0 : i64, tpu.core_type = #tpu.core_type<tc>, window_params = [{transform_indices = @transform_0, window_bounds = array<i64: 4, 32>}, {transform_indices = @transform_1, window_bounds = array<i64: 4, 32>}, {pipeline_mode = #tpu.pipeline_mode<synchronous>, transform_indices = @transform_2, window_bounds = array<i64: 32, 48>}, {pipeline_mode = #tpu.pipeline_mode<synchronous>, transform_indices = @transform_3, window_bounds = array<i64: 1, 48>}, {transform_indices = @transform_4, window_bounds = array<i64: 2, 4, 48>}]} {
    %c0 = arith.constant 0 : index
    %c0_0 = arith.constant 0 : index
    %0 = vector.load %arg3[%c0, %c0_0] : memref<32x48xf32, #tpu.memory_space<vmem>>, vector<32x48xf32>
    %c0_1 = arith.constant 0 : index
    %c0_2 = arith.constant 0 : index
    %1 = vector.load %arg4[%c0_1, %c0_2] : memref<1x48xf32, #tpu.memory_space<vmem>>, vector<1x48xf32>
    %c0_3 = arith.constant 0 : index
    %c0_4 = arith.constant 0 : index
    %2 = vector.load %arg1[%c0_3, %c0_4] : memref<4x32xf32, #tpu.memory_space<vmem>>, vector<4x32xf32>
    %cst = arith.constant dense<0.000000e+00> : vector<4x48xf32>
    %3 = tpu.matmul %2, %0, %cst {dimension_numbers = #tpu.dot_dimension_numbers<[1], [0], [0], [1], [0, 0, 1, 1], [], []>} : vector<4x32xf32>, vector<32x48xf32>, vector<4x48xf32> -> vector<4x48xf32>
    %4 = vector.broadcast %1 : vector<1x48xf32> to vector<4x48xf32>
    %5 = arith.addf %3, %4 : vector<4x48xf32>
    %c0_5 = arith.constant 0 : index
    %c0_6 = arith.constant 0 : index
    %6 = vector.load %arg2[%c0_5, %c0_6] : memref<4x32xf32, #tpu.memory_space<vmem>>, vector<4x32xf32>
    %cst_7 = arith.constant dense<0.000000e+00> : vector<4x48xf32>
    %7 = tpu.matmul %6, %0, %cst_7 {dimension_numbers = #tpu.dot_dimension_numbers<[1], [0], [0], [1], [0, 0, 1, 1], [], []>} : vector<4x32xf32>, vector<32x48xf32>, vector<4x48xf32> -> vector<4x48xf32>
    %8 = vector.broadcast %1 : vector<1x48xf32> to vector<4x48xf32>
    %9 = arith.addf %7, %8 : vector<4x48xf32>
    %c0_8 = arith.constant 0 : index
    %c0_9 = arith.constant 0 : index
    %c0_10 = arith.constant 0 : index
    %10 = vector.load %arg5[%c0_8, %c0_9, %c0_10] : memref<2x4x48xf32, #tpu.memory_space<vmem>>, vector<1x4x48xf32>
    %11 = vector.shape_cast %10 : vector<1x4x48xf32> to vector<4x48xf32>
    %12 = vector.shape_cast %5 : vector<4x48xf32> to vector<1x4x48xf32>
    tpu.vector_store %arg5[%c0_8, %c0_9, %c0_10], %12 {strides = array<i32>} : memref<2x4x48xf32, #tpu.memory_space<vmem>>, vector<1x4x48xf32>,
    %c1 = arith.constant 1 : index
    %c0_11 = arith.constant 0 : index
    %c0_12 = arith.constant 0 : index
    %13 = vector.load %arg5[%c1, %c0_11, %c0_12] : memref<2x4x48xf32, #tpu.memory_space<vmem>>, vector<1x4x48xf32>
    %14 = vector.shape_cast %13 : vector<1x4x48xf32> to vector<4x48xf32>
    %15 = vector.shape_cast %9 : vector<4x48xf32> to vector<1x4x48xf32>
    tpu.vector_store %arg5[%c1, %c0_11, %c0_12], %15 {strides = array<i32>} : memref<2x4x48xf32, #tpu.memory_space<vmem>>, vector<1x4x48xf32>,
    return
  }
  func.func @transform_0(%arg0: i32) -> (i32, i32) {
    %c0_i32 = arith.constant 0 : i32
    %c0_i32_0 = arith.constant 0 : i32
    return %arg0, %c0_i32 : i32, i32
  }
  func.func @transform_1(%arg0: i32) -> (i32, i32) {
    %c0_i32 = arith.constant 0 : i32
    %c0_i32_0 = arith.constant 0 : i32
    return %arg0, %c0_i32 : i32, i32
  }
  func.func @transform_2(%arg0: i32) -> (i32, i32) {
    %c0_i32 = arith.constant 0 : i32
    %c0_i32_0 = arith.constant 0 : i32
    %c0_i32_1 = arith.constant 0 : i32
    return %c0_i32, %c0_i32_0 : i32, i32
  }
  func.func @transform_3(%arg0: i32) -> (i32, i32) {
    %c0_i32 = arith.constant 0 : i32
    %c0_i32_0 = arith.constant 0 : i32
    %c0_i32_1 = arith.constant 0 : i32
    return %c0_i32, %c0_i32_0 : i32, i32
  }
  func.func @transform_4(%arg0: i32) -> (i32, i32, i32) {
    %c0_i32 = arith.constant 0 : i32
    %c0_i32_0 = arith.constant 0 : i32
    %c0_i32_1 = arith.constant 0 : i32
    return %c0_i32, %arg0, %c0_i32_0 : i32, i32, i32
  }
}

</mosaic_0001>

<llo_original>
// kernel: tpu_custom_call.1
$region0: #{tpu_custom_call.1}
  #allocation0 [shape = 'u32[]', space=smem, size = 0x4, offset = 0x4, fixed_abs, tag = 'smem constant byte address 0x4 - core index']
  #allocation1 [shape = 'u32[72,128]{1,0:T(1,128)}', space=vmem, size = 0x9000, scoped, tag = 'internal scratch']
  %s0 = inlined_call_operand.hbm [shape: f32[4,32], index: 0, kind: input, shape index: {}]
  %s1 = inlined_call_operand.hbm [shape: f32[4,32], index: 1, kind: input, shape index: {}]
  %s2 = inlined_call_operand.hbm [shape: f32[32,48], index: 2, kind: input, shape index: {}]
  %s3 = inlined_call_operand.vmem [shape: f32[1,48], index: 3, kind: input, shape index: {}]
  %s4 = inlined_call_operand.hbm [shape: f32[2,4,48], index: 4, kind: output, shape index: {}]
  %s5 = sld [smem:[#allocation0]]
  $region38: #{tpu_custom_call.1} parent=0
    _
  %s7 = ssub.s32 1, %s5
  %s8 = scalar_select 0, %s7, %s5
  $region1: #{tpu_custom_call.1} parent=0
    #allocation2 [shape = 'u8[2048]{0}', space=vmem, size = 0x800, scoped, tag = 'input window, operand 0, single buffered']
    #allocation3 [shape = 's32[1]{0}', space=sflag, size = 0x4, scoped, tag = 'scoped memory for tpu_custom_call.1']
    #allocation4 [shape = 's32[1]{0}', space=sflag, size = 0x4, scoped, tag = 'scoped memory for tpu_custom_call.1']
    #allocation5 [shape = 'u8[2048]{0}', space=vmem, size = 0x800, scoped, tag = 'input window, operand 1, single buffered']
    #allocation6 [shape = 's32[1]{0}', space=sflag, size = 0x4, scoped, tag = 'scoped memory for tpu_custom_call.1']
    #allocation7 [shape = 'u8[16384]{0}', space=vmem, size = 0x4000, scoped, tag = 'input window, operand 2, single buffered']
    #allocation8 [shape = 'u8[4096]{0}', space=vmem, size = 0x1000, scoped, tag = 'output window, operand 0, single buffered']
    %9 = vsyncpa [#allocation3], 0
    %10 = vsyncpa [#allocation6], 0
    %11 = vsyncpa [#allocation4], 0
    // Predicated region
    $region2: #{tpu_custom_call.1} parent=1 // pred_check
      _
    $region3: #{tpu_custom_call.1} parent=1 // pred_check_branch
      %13 = sbr.rel (0) target = $region5
    $region4: #{tpu_custom_call.1} parent=1 // pred_region
      %15 = vsyncadd [#allocation3], 0
      %s17 = sshll.u32 %s0, 4
      %s18 = int_to_ptr.hbm [resolvable:$true] %s17
      %s19 = sshll.u32 [#allocation2], 4
      %s20 = int_to_ptr.vmem [resolvable:$true] %s19
      %22 = dma.hbm_to_vmem [thread:$0]  %s18, 64, %s20, [#allocation3]
    $region5: #{tpu_custom_call.1} parent=1 // pred_fallthru
      _
    // Predicated region
    $region6: #{tpu_custom_call.1} parent=1 // pred_check
      _
    $region7: #{tpu_custom_call.1} parent=1 // pred_check_branch
      %24 = sbr.rel (0) target = $region9
    $region8: #{tpu_custom_call.1} parent=1 // pred_region
      %26 = vsyncadd [#allocation6], 0
      %s28 = sshll.u32 %s1, 4
      %s29 = int_to_ptr.hbm [resolvable:$true] %s28
      %s30 = sshll.u32 [#allocation5], 4
      %s31 = int_to_ptr.vmem [resolvable:$true] %s30
      %33 = dma.hbm_to_vmem [thread:$0]  %s29, 64, %s31, [#allocation6]
    $region9: #{tpu_custom_call.1} parent=1 // pred_fallthru
      _
    // Predicated region
    $region10: #{tpu_custom_call.1} parent=1 // pred_check
      _
    $region11: #{tpu_custom_call.1} parent=1 // pred_check_branch
      %35 = sbr.rel (0) target = $region13
    $region12: #{tpu_custom_call.1} parent=1 // pred_region
      %37 = vsyncadd [#allocation6], 0
      %s38 = sshll.u32 %s2, 4
      %s39 = int_to_ptr.hbm [resolvable:$true] %s38
      %s40 = sshll.u32 [#allocation7], 4
      %s41 = int_to_ptr.vmem [resolvable:$true] %s40
      %46 = dma.hbm_to_vmem [thread:$0]  %s39, 512, %s41, [#allocation6], 128, 128, 8
    $region13: #{tpu_custom_call.1} parent=1 // pred_fallthru
      _
    // Predicated region
    $region14: #{tpu_custom_call.1} parent=1 // pred_check
      _
    $region15: #{tpu_custom_call.1} parent=1 // pred_check_branch
      %48 = sbr.rel (0) target = $region17
    $region16: #{tpu_custom_call.1} parent=1 // pred_region
      _
    $region17: #{tpu_custom_call.1} parent=1 // pred_fallthru
      _
    // Predicated region
    $region18: #{tpu_custom_call.1} parent=1 // pred_check
      _
    $region19: #{tpu_custom_call.1} parent=1 // pred_check_branch
      %50 = sbr.rel (0) target = $region21
    $region20: #{tpu_custom_call.1} parent=1 // pred_region
      %52 = dma.done [#allocation3], 64
    $region21: #{tpu_custom_call.1} parent=1 // pred_fallthru
      _
    // Predicated region
    $region22: #{tpu_custom_call.1} parent=1 // pred_check
      _
    $region23: #{tpu_custom_call.1} parent=1 // pred_check_branch
      %54 = sbr.rel (0) target = $region25
    $region24: #{tpu_custom_call.1} parent=1 // pred_region
      %56 = dma.done [#allocation6], 64
    $region25: #{tpu_custom_call.1} parent=1 // pred_fallthru
      _
    // Predicated region
    $region26: #{tpu_custom_call.1} parent=1 // pred_check
      _
    $region27: #{tpu_custom_call.1} parent=1 // pred_check_branch
      %58 = sbr.rel (0) target = $region29
    $region28: #{tpu_custom_call.1} parent=1 // pred_region
      %60 = dma.done [#allocation6], 512
    $region29: #{tpu_custom_call.1} parent=1 // pred_fallthru
      _
    %v61 = vld [vmem:[#allocation7] sm:$0xff]
    %v62 = vld [vmem:[#allocation7 + $0x8] sm:$0xff]
    %v63 = vld [vmem:[#allocation7 + $0x10] sm:$0xff]
    %v64 = vld [vmem:[#allocation7 + $0x18] sm:$0xff]
    %v65 = vld [vmem:[%s3] sm:$0x1]
    %v66 = vld [vmem:[#allocation2] sm:$0xf]
    %v68 = vperm.slane %v65, 0
    %vm70 = vcmask 261120
    %v72 = vsel %vm70, %v66, 0
    %74 = vmatpush.msra.mxu0 0.0
    %75 = vmatpush.msra.mxu0 0.0
    %76 = vmatpush.msra.mxu0 0.0
    %77 = vmatpush.msra.mxu0 0.0
    %78 = vmatpush.msra.mxu0 0.0
    %79 = vmatpush.msra.mxu0 0.0
    %80 = vmatpush.msra.mxu0 0.0
    %81 = vmatpush.msra.mxu0 0.0
    %82 = vmatpush.msra.mxu0 0.0
    %83 = vmatpush.msra.mxu0 0.0
    %84 = vmatpush.msra.mxu0 0.0
    %85 = vmatpush.msra.mxu0 0.0
    %86 = vmatpush.msra.mxu0 %v64
    %87 = vmatpush.msra.mxu0 %v63
    %88 = vmatpush.msra.mxu0 %v62
    %89 = vmatpush.msra.mxu0 %v61
    %90 = vmatmul.f32.gmra.mxu0 %v72
    %v91 = vpop.f32.mrf.mxu0
    %v92 = vadd.f32 %v68, %v91
    %93 = vdwg.mxu0
    %v94 = vld [vmem:[#allocation5] sm:$0xf]
    %v96 = vsel %vm70, %v94, 0
    %98 = vmatpush.msra.mxu0 0.0
    %99 = vmatpush.msra.mxu0 0.0
    %100 = vmatpush.msra.mxu0 0.0
    %101 = vmatpush.msra.mxu0 0.0
    %102 = vmatpush.msra.mxu0 0.0
    %103 = vmatpush.msra.mxu0 0.0
    %104 = vmatpush.msra.mxu0 0.0
    %105 = vmatpush.msra.mxu0 0.0
    %106 = vmatpush.msra.mxu0 0.0
    %107 = vmatpush.msra.mxu0 0.0
    %108 = vmatpush.msra.mxu0 0.0
    %109 = vmatpush.msra.mxu0 0.0
    %110 = vmatpush.msra.mxu0 %v64
    %111 = vmatpush.msra.mxu0 %v63
    %112 = vmatpush.msra.mxu0 %v62
    %113 = vmatpush.msra.mxu0 %v61
    %114 = vmatmul.f32.gmra.mxu0 %v96
    %v115 = vpop.f32.mrf.mxu0
    %v116 = vadd.f32 %v68, %v115
    %117 = vdwg.mxu0
    %vm118 = vcmask 388096
    %119 = vst.msk [vmem:[#allocation8] sm:$0xf] %vm118, %v92
    %s120 = scalar_lea.vmem [#allocation8], 4
    %121 = vst.msk [vmem:[%s120] sm:$0xf] %vm118, %v116
    // Predicated region
    $region30: #{tpu_custom_call.1} parent=1 // pred_check
      _
    $region31: #{tpu_custom_call.1} parent=1 // pred_check_branch
      %123 = sbr.rel (0) target = $region33
    $region32: #{tpu_custom_call.1} parent=1 // pred_region
      %125 = vsyncadd [#allocation4], 0
      %s126 = sshll.u32 [#allocation8], 4
      %s127 = int_to_ptr.vmem [resolvable:$true] %s126
      %s128 = sshll.u32 %s4, 4
      %s129 = int_to_ptr.hbm [resolvable:$true] %s128
      %134 = dma.vmem_to_hbm [thread:$0]  %s127, 128, %s129, [#allocation4], 64, 64, 4
    $region33: #{tpu_custom_call.1} parent=1 // pred_fallthru
      _
    // Predicated region
    $region34: #{tpu_custom_call.1} parent=1 // pred_check
      _
    $region35: #{tpu_custom_call.1} parent=1 // pred_check_branch
      %136 = sbr.rel (0) target = $region37
    $region36: #{tpu_custom_call.1} parent=1 // pred_region
      %138 = dma.done [#allocation4], 128
    $region37: #{tpu_custom_call.1} parent=1 // pred_fallthru
      _
    %139 = vsyncpa [#allocation3], 1
    %140 = vsyncpa [#allocation6], 1
    %141 = vsyncpa [#allocation4], 1

</llo_original>
